<compile_context>
chip_gen: v7x
topology: tpu7x:2x2x1
jax: 0.10.0
libtpu: 0.0.40
codegen_flags: <defaults>
</compile_context>

<pallas_src>
import jax
import jax.numpy as jnp
from jax import lax
from jax.experimental import pallas as pl
from jax.experimental.pallas import tpu as pltpu


def _pick_seq_tile(S, D, itemsize):
    """Largest sequence tile <=256 rows / ~1 MiB that divides S and is 8-aligned.

    The ~1 MiB per-tile cap keeps double-buffered pos/out/gather tiles far below
    even v7x's 64 MiB VMEM (32 MiB default scoped limit)."""
    cap = min(S, 256, max(8, (1 << 20) // max(1, D * itemsize)))
    for t in range(cap, 7, -1):
        if S % t == 0 and t % 8 == 0:
            return t
    return S  # short / odd sequence lengths: one tile covering the whole sequence


# --------------------------------------------------------------------------- #
# Small-vocab fast path: VMEM-resident table + one-hot MXU gather.
# --------------------------------------------------------------------------- #
def _small_vocab_kernel(ids_ref, word_ref, pos_ref, out_ref):
    # ids_ref : VMEM (tS, 1) int32   word_ref: VMEM (V, D)
    # pos_ref : VMEM (tS, D)         out_ref : VMEM (tS, D)  (batch dim squeezed)
    tS = out_ref.shape[0]
    V = word_ref.shape[0]
    ids = ids_ref[...]                                      # (tS, 1)
    cols = lax.broadcasted_iota(jnp.int32, (tS, V), 1)      # (tS, V)
    one_hot = (ids == cols).astype(jnp.float32)             # exact 0/1 rows
    tok = jnp.dot(one_hot, word_ref[...].astype(jnp.float32),
                  preferred_element_type=jnp.float32,
                  precision=lax.Precision.HIGHEST)          # MXU gather
    out_ref[...] = (tok + pos_ref[...].astype(jnp.float32)).astype(out_ref.dtype)


def _embeddings_small_vocab(ids, word_table, pos_table, B, S, seq_tile, out_dtype):
    V, D = word_table.shape
    ids_col = ids.reshape(B, S, 1)   # (tS, 1) blocks broadcast cleanly against (tS, V)
    return pl.pallas_call(
        _small_vocab_kernel,
        out_shape=jax.ShapeDtypeStruct((B, S, D), out_dtype),
        grid=(S // seq_tile, B),                            # batch innermost
        in_specs=[
            pl.BlockSpec((None, seq_tile, 1), lambda s, b: (b, s, 0)),
            # Constant index_map: the table is DMA'd to VMEM once and reused.
            pl.BlockSpec((V, D), lambda s, b: (0, 0)),
            pl.BlockSpec((seq_tile, D), lambda s, b: (s, 0)),
        ],
        out_specs=pl.BlockSpec((None, seq_tile, D), lambda s, b: (b, s, 0)),
        compiler_params=pltpu.CompilerParams(
            dimension_semantics=("parallel", "parallel")),
    )(ids_col, word_table, pos_table)


# --------------------------------------------------------------------------- #
# Large-vocab path: HBM-resident table + double-buffered row-DMA gather.
# --------------------------------------------------------------------------- #
def _hbm_gather_kernel(ids_ref, word_hbm, pos_ref, out_ref, gather_buf, sems):
    # ids_ref   : SMEM (B*S,) int32   (scalar-prefetched token ids, flattened)
    # word_hbm  : HBM  (V, D)         (full word table, memory_space=pl.ANY)
    # pos_ref   : VMEM (tS, D)        (position rows for this sequence tile)
    # out_ref   : VMEM (tS, D)        (one (batch, seq-tile) output block)
    # gather_buf: VMEM (2, tS, D)     (double-buffered gathered word rows)
    # sems      : DMA semaphores (2,) (one shared semaphore per buffer slot)
    s = pl.program_id(0)
    b = pl.program_id(1)
    n_b = pl.num_programs(1)
    n_s = pl.num_programs(0)
    tS = out_ref.shape[0]
    S = n_s * tS

    def issue_tile(b_idx, slot):
        # Issue every row-gather DMA for batch `b_idx` of this sequence tile;
        # all rows signal the same per-slot semaphore and proceed concurrently.
        base = b_idx * S + s * tS

        def body(i, carry):
            tok = ids_ref[base + i]
            pltpu.make_async_copy(
                word_hbm.at[pl.ds(tok, 1), :],
                gather_buf.at[slot, pl.ds(i, 1), :],
                sems.at[slot],
            ).start()
            return carry

        lax.fori_loop(0, tS, body, 0, unroll=True)

    # Prime the pipeline at the start of each inner batch loop.  Only the seq
    # axis is marked "parallel" (core-splittable), so every core's chunk begins
    # at b == 0 and priming is guaranteed to execute.
    @pl.when(b == 0)
    def _():
        issue_tile(0, 0)

    # Prefetch the next batch's rows while we compute on the current slot (all
    # ids are already in SMEM, so the cross-step prefetch is free to issue).
    @pl.when(b + 1 < n_b)
    def _():
        issue_tile(b + 1, (b + 1) & 1)

    # Single wait draining every row DMA of the current slot: each row copy
    # incremented sems[slot] by one row's bytes; this descriptor covers the full
    # (tS, D) tile, so one wait accounts for all tS of them.
    slot = b & 1
    pltpu.make_async_copy(
        word_hbm.at[pl.ds(0, tS), :],
        gather_buf.at[slot],
        sems.at[slot],
    ).wait()

    # One full-block vector add + one lane-dense (tS, D) store. Dropout = identity.
    x = gather_buf[slot].astype(jnp.float32) + pos_ref[...].astype(jnp.float32)
    out_ref[...] = x.astype(out_ref.dtype)


def _embeddings_hbm(ids, word_table, pos_table, B, S, seq_tile, out_dtype):
    V, D = word_table.shape
    assert V >= seq_tile, "hbm-gather path expects vocab_size >= seq_tile"
    # 1-D SMEM packing (2-D SMEM arrays pad to 8x128-word granules).
    # TODO(synk): chunk the id prefetch instead of asserting for very long B*S.
    assert B * S <= 64 * 1024, "ids scalar-prefetch would not fit comfortably in SMEM"
    ids_flat = ids.reshape(B * S)

    grid_spec = pltpu.PrefetchScalarGridSpec(
        num_scalar_prefetch=1,                      # token ids -> SMEM (drive row DMAs)
        grid=(S // seq_tile, B),                    # batch innermost: pos tile reused
        in_specs=[
            pl.BlockSpec(memory_space=pl.ANY),      # word table stays in HBM
            pl.BlockSpec((seq_tile, D), lambda s, b, ids: (s, 0)),
        ],
        out_specs=pl.BlockSpec((None, seq_tile, D), lambda s, b, ids: (b, s, 0)),
        scratch_shapes=[
            pltpu.VMEM((2, seq_tile, D), word_table.dtype),   # double-buffered gather
            pltpu.SemaphoreType.DMA((2,)),                    # one shared sem per slot
        ],
    )
    return pl.pallas_call(
        _hbm_gather_kernel,
        out_shape=jax.ShapeDtypeStruct((B, S, D), out_dtype),
        grid_spec=grid_spec,
        compiler_params=pltpu.CompilerParams(
            # seq axis may split across TensorCores; the batch axis must remain
            # sequential because the gather is double-buffered across it.
            dimension_semantics=("parallel", "arbitrary")),
    )(ids_flat, word_table, pos_table)


# --------------------------------------------------------------------------- #
# Public forward.
# --------------------------------------------------------------------------- #
def embeddings_forward(input_ids, word_table, pos_table, *, seq_tile=None,
                       out_dtype=None, small_vocab_bytes=2 * 1024 * 1024,
                       force_hbm_gather=False):
    """Embeddings.forward: word_emb[input_ids] + pos_emb[:S]; identity dropout."""
    B, S = input_ids.shape
    V, D = word_table.shape
    assert pos_table.shape[1] == D and pos_table.shape[0] >= S
    out_dtype = jnp.dtype(out_dtype if out_dtype is not None else word_table.dtype)
    itemsize = jnp.dtype(word_table.dtype).itemsize

    if seq_tile is None:
        seq_tile = _pick_seq_tile(S, D, itemsize)
    assert S % seq_tile == 0, "seq_tile must divide S"

    # nn.Embedding would raise on out-of-range ids; clamp so a bad id can never
    # drive an out-of-bounds HBM read / one-hot row.
    ids = jnp.clip(input_ids.astype(jnp.int32), 0, V - 1)

    if V * D * itemsize <= small_vocab_bytes and not force_hbm_gather:
        return _embeddings_small_vocab(ids, word_table, pos_table, B, S, seq_tile, out_dtype)
    return _embeddings_hbm(ids, word_table, pos_table, B, S, seq_tile, out_dtype)


if __name__ == "__main__":
    # config: vocab_size=64, max_seq_len=16, embedding_dim=transformer_dim=128
    B, S = 2, 8
    V, MAX_SEQ, D = 64, 16, 128

    key = jax.random.PRNGKey(0)
    k_ids, k_word, k_pos = jax.random.split(key, 3)

    input_ids = jax.random.randint(k_ids, (B, S), 0, V, dtype=jnp.int32)
    # nn.Embedding weights, init normal(std=0.02), deterministic in-script.
    word_table = 0.02 * jax.random.normal(k_word, (V, D), dtype=jnp.float32)
    pos_table = 0.02 * jax.random.normal(k_pos, (MAX_SEQ, D), dtype=jnp.float32)

    # Pure-JAX reference (word lookup + position lookup + identity dropout).
    ref = word_table[input_ids] + pos_table[jnp.arange(S)][None, :, :]

    # 1) Small-vocab fast path (VMEM-resident table, one-hot MXU gather).
    out_small = jax.block_until_ready(
        embeddings_forward(input_ids, word_table, pos_table))
    assert out_small.shape == (B, S, D) and out_small.dtype == jnp.float32
    # Gather matmul is requested at HIGHEST precision (error ~1e-6); tolerance
    # leaves headroom for the MXU f32 pass decomposition.
    assert jnp.allclose(out_small, ref, atol=5e-4), "small-vocab path mismatch"

    # 2) Large-vocab path (HBM table, double-buffered row-DMA gather) — exact.
    out_hbm = jax.block_until_ready(
        embeddings_forward(input_ids, word_table, pos_table, force_hbm_gather=True))
    assert out_hbm.shape == (B, S, D) and out_hbm.dtype == jnp.float32
    assert jnp.allclose(out_hbm, ref, atol=1e-6), "hbm-gather path mismatch"

    print("KERNEL_OK")
</pallas_src>

<mosaic_0001>
module attributes {stable_mosaic.version = 11 : i64} {
  func.func @_small_vocab_kernel(%arg0: i32, %arg1: i32, %arg2: memref<1x8x1xi32, #tpu.memory_space<vmem>>, %arg3: memref<64x128xf32, #tpu.memory_space<vmem>>, %arg4: memref<8x128xf32, #tpu.memory_space<vmem>>, %arg5: memref<1x8x128xf32, #tpu.memory_space<vmem>>) attributes {dimension_semantics = [#tpu.dimension_semantics<parallel>, #tpu.dimension_semantics<parallel>], iteration_bounds = array<i64: 1, 2>, scalar_prefetch = 0 : i64, scratch_operands = 0 : i64, tpu.core_type = #tpu.core_type<tc>, window_params = [{transform_indices = @transform_0, window_bounds = array<i64: 1, 8, 1>}, {pipeline_mode = #tpu.pipeline_mode<synchronous>, transform_indices = @transform_1, window_bounds = array<i64: 64, 128>}, {transform_indices = @transform_2, window_bounds = array<i64: 8, 128>}, {transform_indices = @transform_3, window_bounds = array<i64: 1, 8, 128>}]} {
    %c0 = arith.constant 0 : index
    %c0_0 = arith.constant 0 : index
    %c0_1 = arith.constant 0 : index
    %0 = vector.load %arg2[%c0, %c0_0, %c0_1] : memref<1x8x1xi32, #tpu.memory_space<vmem>>, vector<1x8x1xi32>
    %1 = vector.shape_cast %0 : vector<1x8x1xi32> to vector<8x1xi32>
    %2 = tpu.iota {dimensions = array<i32: 1>} : vector<8x64xi32>
    %3 = vector.broadcast %1 : vector<8x1xi32> to vector<8x64xi32>
    %4 = arith.cmpi eq, %3, %2 : vector<8x64xi32>
    %5 = arith.extui %4 : vector<8x64xi1> to vector<8x64xi32>
    %6 = arith.sitofp %5 : vector<8x64xi32> to vector<8x64xf32>
    %c0_2 = arith.constant 0 : index
    %c0_3 = arith.constant 0 : index
    %7 = vector.load %arg3[%c0_2, %c0_3] : memref<64x128xf32, #tpu.memory_space<vmem>>, vector<64x128xf32>
    %cst = arith.constant dense<0.000000e+00> : vector<8x128xf32>
    %8 = tpu.matmul %6, %7, %cst {dimension_numbers = #tpu.dot_dimension_numbers<[1], [0], [0], [1], [0, 0, 1, 1], [], []>, precision = #tpu.contract_precision<fp32>} : vector<8x64xf32>, vector<64x128xf32>, vector<8x128xf32> -> vector<8x128xf32>
    %c0_4 = arith.constant 0 : index
    %c0_5 = arith.constant 0 : index
    %9 = vector.load %arg4[%c0_4, %c0_5] : memref<8x128xf32, #tpu.memory_space<vmem>>, vector<8x128xf32>
    %10 = arith.addf %8, %9 : vector<8x128xf32>
    %c0_6 = arith.constant 0 : index
    %c0_7 = arith.constant 0 : index
    %c0_8 = arith.constant 0 : index
    %11 = vector.load %arg5[%c0_6, %c0_7, %c0_8] : memref<1x8x128xf32, #tpu.memory_space<vmem>>, vector<1x8x128xf32>
    %12 = vector.shape_cast %11 : vector<1x8x128xf32> to vector<8x128xf32>
    %13 = vector.shape_cast %10 : vector<8x128xf32> to vector<1x8x128xf32>
    tpu.vector_store %arg5[%c0_6, %c0_7, %c0_8], %13 {strides = array<i32>} : memref<1x8x128xf32, #tpu.memory_space<vmem>>, vector<1x8x128xf32>,
    return
  }
  func.func @transform_0(%arg0: i32, %arg1: i32) -> (i32, i32, i32) {
    %c0_i32 = arith.constant 0 : i32
    %c0_i32_0 = arith.constant 0 : i32
    return %arg1, %arg0, %c0_i32 : i32, i32, i32
  }
  func.func @transform_1(%arg0: i32, %arg1: i32) -> (i32, i32) {
    %c0_i32 = arith.constant 0 : i32
    %c0_i32_0 = arith.constant 0 : i32
    %c0_i32_1 = arith.constant 0 : i32
    return %c0_i32, %c0_i32_0 : i32, i32
  }
  func.func @transform_2(%arg0: i32, %arg1: i32) -> (i32, i32) {
    %c0_i32 = arith.constant 0 : i32
    %c0_i32_0 = arith.constant 0 : i32
    return %arg0, %c0_i32 : i32, i32
  }
  func.func @transform_3(%arg0: i32, %arg1: i32) -> (i32, i32, i32) {
    %c0_i32 = arith.constant 0 : i32
    %c0_i32_0 = arith.constant 0 : i32
    return %arg1, %arg0, %c0_i32 : i32, i32, i32
  }
}

</mosaic_0001>

<llo_original>
// kernel: tpu_custom_call.1
$region0: #{tpu_custom_call.1}
  #allocation0 [shape = 'u32[]', space=smem, size = 0x4, offset = 0x4, fixed_abs, tag = 'smem constant byte address 0x4 - core index']
  #allocation1 [shape = 'u32[144,128]{1,0:T(1,128)}', space=vmem, size = 0x12000, scoped, tag = 'internal scratch']
  %s0 = inlined_call_operand.vmem [shape: s32[2,8,1], index: 0, kind: input, shape index: {}]
  %s1 = inlined_call_operand.hbm [shape: f32[64,128], index: 1, kind: input, shape index: {}]
  %s2 = inlined_call_operand.vmem [shape: f32[16,128], index: 2, kind: input, shape index: {}]
  %s3 = inlined_call_operand.hbm [shape: f32[2,8,128], index: 3, kind: output, shape index: {}]
  %s4 = sld [smem:[#allocation0]]
  $region49: #{tpu_custom_call.1} parent=0
    _
  %s6 = ssub.s32 1, %s4
  %s7 = scalar_select 0, %s6, %s4
  $region1: #{tpu_custom_call.1} parent=0
    #allocation2 [shape = 'u8[32768]{0}', space=vmem, size = 0x8000, scoped, tag = 'input window, operand 1, single buffered']
    #allocation3 [shape = 's32[2]{0}', space=sflag, size = 0x8, scoped, tag = 'scoped memory for tpu_custom_call.1']
    #allocation4 [shape = 's32[2]{0}', space=sflag, size = 0x8, scoped, tag = 'scoped memory for tpu_custom_call.1']
    #allocation5 [shape = 'u8[8192]{0}', space=vmem, size = 0x2000, scoped, tag = 'output window, operand 0']
    %8 = vsyncpa [#allocation3], 0
    %9 = vsyncpa [#allocation4], 0
    %s10 = scalar_lea.sflag [#allocation4], 1
    %11 = vsyncpa %s10, 0
    loop: start=0, step=1, limit=4
    $region2: #{tpu_custom_call.1} parent=1 // loop_pre_header
      _
    $region3: #{tpu_custom_call.1} parent=1 // loop_header
      %s13 = sphi 0, %s17
      %p14 = scmp.ge.s32.totalorder %s13, 4
      %s20 = sphi 0, %s32
      %s21 = sphi 0, %s28
      %s22 = sphi 0, %s20
      %s23 = sphi 0, %s21
      %s24 = sphi 0, %s22
      %s25 = sphi 0, %s23
      %s37 = sphi 0, %s39
      %s40 = sphi 0, %s37
      %s41 = sphi 0, %s40
      %s57 = sphi 0, %s41
      %s61 = sphi 0, %s61
      %s63 = sphi 0, %s61
      %s64 = sphi 0, %s63
      %s78 = sphi 0, %s64
      %s84 = sphi 0, %s86
      %s87 = sphi 0, %s84
      %s88 = sphi 0, %s87
      %s104 = sphi 0, %s88
      %s112 = sphi 0, %s114
      %s115 = sphi 0, %s112
      %s116 = sphi 0, %s115
      %s132 = sphi 0, %s116
    $region4: #{tpu_custom_call.1} parent=1 // loop_header_branch
      %16 = sbr.rel (%p14) target = $region8
    $region5: #{tpu_custom_call.1} parent=1 // loop_body
      %s18 = ssub.s32 %s13, 1
      %s19 = ssub.s32 %s13, 2
      %s26 = sadd.s32 1, %s21
      %p27 = scmp.ge.s32.totalorder %s26, 2
      %s28 = scalar_select %p27, 0, %s26
      %s29 = sadd.s32 1, %s20
      %s30 = scalar_select %p27, %s29, %s20
      %p31 = scmp.ge.s32.totalorder %s30, 1
      %s32 = scalar_select %p31, 0, %s30
      %s33 = ssub.s32 %s21, %s28
      %s34 = ssub.s32 %s20, %s32
      %s35 = sor.u32 %s33, %s34
      %p36 = scmp.eq.s32.totalorder %s35, 0
      %s38 = sadd.s32 %s37, 1
      %s39 = scalar_select %p36, %s37, %s38
      %p42 = pneg %p36
      %p43 = scmp.eq.s32.totalorder %s13, 1
      %p44 = por %p42, %p43
      %p45 = scmp.ne.s32.totalorder %s37, %s40
      %p46 = scmp.eq.s32.totalorder %s13, 0
      %p47 = por %p45, %p46
      %p48 = scmp.ne.s32.totalorder %s37, %s40
      %p49 = scmp.eq.s32.totalorder %s18, 1
      %p50 = por %p48, %p49
      %p51 = scmp.ne.s32.totalorder %s40, %s41
      %p52 = scmp.eq.s32.totalorder %s18, 0
      %p53 = por %p51, %p52
      %p54 = scmp.ne.s32.totalorder %s40, %s41
      %p55 = scmp.eq.s32.totalorder %s19, 1
      %p56 = por %p54, %p55
      %p58 = scmp.ne.s32.totalorder %s41, %s57
      %p59 = scmp.eq.s32.totalorder %s19, 0
      %p60 = por %p58, %p59
      %s62 = sadd.s32 %s61, 1
      %p65 = scmp.eq.s32.totalorder %s13, 1
      %p66 = scmp.ne.s32.totalorder %s61, %s63
      %p67 = scmp.eq.s32.totalorder %s13, 0
      %p68 = por %p66, %p67
      %p69 = scmp.ne.s32.totalorder %s61, %s63
      %p70 = scmp.eq.s32.totalorder %s18, 1
      %p71 = por %p69, %p70
      %p72 = scmp.ne.s32.totalorder %s63, %s64
      %p73 = scmp.eq.s32.totalorder %s18, 0
      %p74 = por %p72, %p73
      %p75 = scmp.ne.s32.totalorder %s63, %s64
      %p76 = scmp.eq.s32.totalorder %s19, 1
      %p77 = por %p75, %p76
      %p79 = scmp.ne.s32.totalorder %s64, %s78
      %p80 = scmp.eq.s32.totalorder %s19, 0
      %p81 = por %p79, %p80
      %s82 = ssub.s32 %s20, %s32
      %p83 = scmp.eq.s32.totalorder %s82, 0
      %s85 = sadd.s32 %s84, 1
      %s86 = scalar_select %p83, %s84, %s85
      %p89 = pneg %p83
      %p90 = scmp.eq.s32.totalorder %s13, 1
      %p91 = por %p89, %p90
      %p92 = scmp.ne.s32.totalorder %s84, %s87
      %p93 = scmp.eq.s32.totalorder %s13, 0
      %p94 = por %p92, %p93
      %p95 = scmp.ne.s32.totalorder %s84, %s87
      %p96 = scmp.eq.s32.totalorder %s18, 1
      %p97 = por %p95, %p96
      %p98 = scmp.ne.s32.totalorder %s87, %s88
      %p99 = scmp.eq.s32.totalorder %s18, 0
      %p100 = por %p98, %p99
      %p101 = scmp.ne.s32.totalorder %s87, %s88
      %p102 = scmp.eq.s32.totalorder %s19, 1
      %p103 = por %p101, %p102
      %p105 = scmp.ne.s32.totalorder %s88, %s104
      %p106 = scmp.eq.s32.totalorder %s19, 0
      %p107 = por %p105, %p106
      %s108 = ssub.s32 %s21, %s28
      %s109 = ssub.s32 %s20, %s32
      %s110 = sor.u32 %s108, %s109
      %p111 = scmp.eq.s32.totalorder %s110, 0
      %s113 = sadd.s32 %s112, 1
      %s114 = scalar_select %p111, %s112, %s113
      %p117 = pneg %p111
      %p118 = scmp.eq.s32.totalorder %s13, 1
      %p119 = por %p117, %p118
      %p120 = scmp.ne.s32.totalorder %s112, %s115
      %p121 = scmp.eq.s32.totalorder %s13, 0
      %p122 = por %p120, %p121
      %p123 = scmp.ne.s32.totalorder %s112, %s115
      %p124 = scmp.eq.s32.totalorder %s18, 1
      %p125 = por %p123, %p124
      %p126 = scmp.ne.s32.totalorder %s115, %s116
      %p127 = scmp.eq.s32.totalorder %s18, 0
      %p128 = por %p126, %p127
      %p129 = scmp.ne.s32.totalorder %s115, %s116
      %p130 = scmp.eq.s32.totalorder %s19, 1
      %p131 = por %p129, %p130
      %p133 = scmp.ne.s32.totalorder %s116, %s132
      %p134 = scmp.eq.s32.totalorder %s19, 0
      %p135 = por %p133, %p134
      %p136 = scmp.le.s32.totalorder 1, %s13
      %p137 = scmp.lt.s32.totalorder %s13, 3
      %p138 = pnand %p136, %p137
      %p139 = pneg %p138
      // Predicated region
      $region9: #{tpu_custom_call.1} parent=5 // pred_check
        _
      $region10: #{tpu_custom_call.1} parent=5 // pred_check_branch
        %141 = sbr.rel (%p138) target = $region12
      $region11: #{tpu_custom_call.1} parent=5 // pred_region
        %s142 = ssub.s32 %s13, 1
        // Predicated region
        $region13: #{tpu_custom_call.1} parent=11 // pred_check
          %p143 = pneg %p74
        $region14: #{tpu_custom_call.1} parent=11 // pred_check_branch
          %145 = sbr.rel (%p143) target = $region16
        $region15: #{tpu_custom_call.1} parent=11 // pred_region
          %s147 = ssub.s32 1024, 1024
          %148 = vsyncadd [#allocation3], %s147
          %s149 = sshll.u32 [#allocation2], 4
          %s150 = int_to_ptr.vmem [resolvable:$true] %s149
          %155 = dma.hbm_to_vmem [thread:$0]  %s1, 1024, %s150, [#allocation3], 128, 128, 8
        $region16: #{tpu_custom_call.1} parent=11 // pred_fallthru
          _
        // Predicated region
        $region17: #{tpu_custom_call.1} parent=11 // pred_check
          %p156 = pneg %p100
        $region18: #{tpu_custom_call.1} parent=11 // pred_check_branch
          %158 = sbr.rel (%p156) target = $region20
        $region19: #{tpu_custom_call.1} parent=11 // pred_region
          %p159 = scmp.lt.s32.totalorder %s22, 1
          %s160 = scalar_select %p159, %s22, 1
          %s161 = smul.addr %s160, 8
          %s162 = scalar_lea.vmem %s2, %s161
        $region20: #{tpu_custom_call.1} parent=11 // pred_fallthru
          _
      $region12: #{tpu_custom_call.1} parent=5 // pred_fallthru
        _
      %p163 = scmp.lt.s32.totalorder %s13, 2
      // Predicated region
      $region21: #{tpu_custom_call.1} parent=5 // pred_check
        %p164 = pneg %p163
      $region22: #{tpu_custom_call.1} parent=5 // pred_check_branch
        %166 = sbr.rel (%p164) target = $region24
      $region23: #{tpu_custom_call.1} parent=5 // pred_region
        // Predicated region
        $region25: #{tpu_custom_call.1} parent=23 // pred_check
          %p167 = pneg %p47
        $region26: #{tpu_custom_call.1} parent=23 // pred_check_branch
          %169 = sbr.rel (%p167) target = $region28
        $region27: #{tpu_custom_call.1} parent=23 // pred_region
          %p170 = scmp.lt.s32.totalorder %s21, 1
          %s171 = scalar_select %p170, %s21, 1
          %p172 = scmp.lt.s32.totalorder %s20, 0
          %s173 = scalar_select %p172, %s20, 0
          %s174 = sadd.s32 %s173, %s171
          %s175 = smul.addr %s174, 8
          %s176 = scalar_lea.vmem %s0, %s175
        $region28: #{tpu_custom_call.1} parent=23 // pred_fallthru
          _
      $region24: #{tpu_custom_call.1} parent=5 // pred_fallthru
        _
      %p177 = scmp.le.s32.totalorder 1, %s13
      %p178 = scmp.lt.s32.totalorder %s13, 3
      %p179 = pnand %p177, %p178
      %p180 = pneg %p179
      // Predicated region
      $region29: #{tpu_custom_call.1} parent=5 // pred_check
        _
      $region30: #{tpu_custom_call.1} parent=5 // pred_check_branch
        %182 = sbr.rel (%p179) target = $region32
      $region31: #{tpu_custom_call.1} parent=5 // pred_region
        %s183 = ssub.s32 %s13, 1
        // Predicated region
        $region33: #{tpu_custom_call.1} parent=31 // pred_check
          %p184 = pneg %p74
        $region34: #{tpu_custom_call.1} parent=31 // pred_check_branch
          %186 = sbr.rel (%p184) target = $region36
        $region35: #{tpu_custom_call.1} parent=31 // pred_region
          %187 = dma.done [#allocation3], 1024
        $region36: #{tpu_custom_call.1} parent=31 // pred_fallthru
          _
        %p188 = scmp.lt.s32.totalorder %s23, 1
        %s189 = scalar_select %p188, %s23, 1
        %p190 = scmp.lt.s32.totalorder %s22, 0
        %s191 = scalar_select %p190, %s22, 0
        %s192 = sadd.s32 %s191, %s189
        %s193 = smul.addr %s192, 8
        %s194 = scalar_lea.vmem %s0, %s193
        %p195 = pneg %p53
        %p196 = pneg %p50
        %p197 = pneg %p74
        %p198 = pneg %p71
        %p199 = scmp.lt.s32.totalorder %s22, 1
        %s200 = scalar_select %p199, %s22, 1
        %s201 = smul.addr %s200, 8
        %s202 = scalar_lea.vmem %s2, %s201
        %p203 = pneg %p100
        %p204 = pneg %p97
        %p205 = pneg %p128
        %p206 = pneg %p125
        %s207 = sand.u32 %s115, 1
        %s208 = scalar_lea.sflag [#allocation4], %s207
        %s209 = sand.u32 %s115, 1
        %s210 = smul.addr %s209, 8
        %s211 = scalar_lea.vmem [#allocation5], %s210
        %p212 = scmp.lt.s32.totalorder %s23, 1
        %s213 = scalar_select %p212, %s23, 1
        %p214 = scmp.lt.s32.totalorder %s22, 0
        %s215 = scalar_select %p214, %s22, 0
        %s216 = sadd.s32 %s215, %s213
        %s217 = smul.addr %s216, 8
        %s218 = scalar_lea.vmem %s0, %s217
        %p219 = scmp.lt.s32.totalorder %s22, 1
        %s220 = scalar_select %p219, %s22, 1
        %s221 = smul.addr %s220, 8
        %s222 = scalar_lea.vmem %s2, %s221
        %v223 = vld [vmem:[%s218] sm:$0xff]
        %v224 = vlaneseq
        %v225 = vand.u32 %v224, 127
        %226 = vset.pattern.permute.xlu0 0
        %227 = vperm.xlu0 %226, %v223
        %v228 = vpop.permute.xlu0 %227
        %vm229 = vcmp.eq.s32.totalorder %v228, %v225
        %v230 = vsel %vm229, 1, 0
        %v231 = vcvt.s32.f32 %v230
        %v232 = vld [vmem:[#allocation2] sm:$0xff]
        %v233 = vld [vmem:[#allocation2 + $0x8] sm:$0xff]
        %v234 = vld [vmem:[#allocation2 + $0x10] sm:$0xff]
        %v235 = vld [vmem:[#allocation2 + $0x18] sm:$0xff]
        %v236 = vld [vmem:[#allocation2 + $0x20] sm:$0xff]
        %v237 = vld [vmem:[#allocation2 + $0x28] sm:$0xff]
        %v238 = vld [vmem:[#allocation2 + $0x30] sm:$0xff]
        %v239 = vld [vmem:[#allocation2 + $0x38] sm:$0xff]
        %v240 = vld [vmem:[%s222] sm:$0xff]
        %vm241 = vcmask 523264
        %v243 = vsel %vm241, %v231, 0
        %245 = vmatprep.subr.mxu0 0.0
        %v246 = vand.u32 %v232, 4294901760
        %247 = vmatpush1.msra.mxu0 %v246
        %248 = vmatprep.subr.mxu0 0.0
        %v249 = vand.u32 %v233, 4294901760
        %250 = vmatpush1.msra.mxu0 %v249
        %251 = vmatprep.subr.mxu0 0.0
        %v252 = vand.u32 %v234, 4294901760
        %253 = vmatpush1.msra.mxu0 %v252
        %254 = vmatprep.subr.mxu0 0.0
        %v255 = vand.u32 %v235, 4294901760
        %256 = vmatpush1.msra.mxu0 %v255
        %257 = vmatprep.subr.mxu0 0.0
        %v258 = vand.u32 %v236, 4294901760
        %259 = vmatpush1.msra.mxu0 %v258
        %260 = vmatprep.subr.mxu0 0.0
        %v261 = vand.u32 %v237, 4294901760
        %262 = vmatpush1.msra.mxu0 %v261
        %263 = vmatprep.subr.mxu0 0.0
        %v264 = vand.u32 %v238, 4294901760
        %265 = vmatpush1.msra.mxu0 %v264
        %266 = vmatprep.subr.mxu0 0.0
        %v267 = vand.u32 %v239, 4294901760
        %268 = vmatpush1.msra.mxu0 %v267
        %269 = vmatprep.subr.mxu0 0.0
        %270 = vmatpush1.msra.mxu0 0.0
        %271 = vmatprep.subr.mxu0 0.0
        %272 = vmatpush1.msra.mxu0 0.0
        %273 = vmatprep.subr.mxu0 0.0
        %274 = vmatpush1.msra.mxu0 0.0
        %275 = vmatprep.subr.mxu0 0.0
        %276 = vmatpush1.msra.mxu0 0.0
        %277 = vmatprep.subr.mxu0 0.0
        %278 = vmatpush1.msra.mxu0 0.0
        %279 = vmatprep.subr.mxu0 0.0
        %280 = vmatpush1.msra.mxu0 0.0
        %281 = vmatprep.subr.mxu0 0.0
        %282 = vmatpush1.msra.mxu0 0.0
        %283 = vmatprep.subr.mxu0 0.0
        %284 = vmatpush1.msra.mxu0 0.0
        %285 = vmatprep.subr.mxu0 0.0
        %286 = vmatpush1.msra.mxu0 0.0
        %287 = vmatprep.subr.mxu0 0.0
        %288 = vmatpush1.msra.mxu0 0.0
        %289 = vmatprep.subr.mxu0 0.0
        %290 = vmatpush1.msra.mxu0 0.0
        %291 = vmatprep.subr.mxu0 0.0
        %292 = vmatpush1.msra.mxu0 0.0
        %293 = vmatprep.subr.mxu0 0.0
        %294 = vmatpush1.msra.mxu0 0.0
        %295 = vmatprep.subr.mxu0 0.0
        %296 = vmatpush1.msra.mxu0 0.0
        %297 = vmatprep.subr.mxu0 0.0
        %298 = vmatpush1.msra.mxu0 0.0
        %299 = vmatprep.subr.mxu0 0.0
        %300 = vmatpush1.msra.mxu0 0.0
        %301 = vmatprep.subr.mxu0 0.0
        %302 = vmatpush1.msra.mxu0 0.0
        %303 = vmatprep.subr.mxu0 0.0
        %304 = vmatpush1.msra.mxu0 0.0
        %305 = vmatprep.subr.mxu0 0.0
        %306 = vmatpush1.msra.mxu0 0.0
        %307 = vmatprep.subr.mxu0 0.0
        %308 = vmatpush1.msra.mxu0 0.0
        %309 = vmatprep.subr.mxu0 0.0
        %310 = vmatpush1.msra.mxu0 0.0
        %311 = vmatprep.subr.mxu0 0.0
        %312 = vmatpush1.msra.mxu0 0.0
        %313 = vmatprep.subr.mxu0 0.0
        %314 = vmatpush1.msra.mxu0 0.0
        %315 = vmatprep.subr.mxu0 0.0
        %316 = vmatpush1.msra.mxu0 0.0
        %317 = vmatprep.mubr.f32.mxu0 0.0
        %v318 = vand.u32 %v243, 4294901760
        %v319 = vsub.f32 %v243, %v318
        %v320 = vand.u32 %v319, 4294901760
        %v321 = vsub.f32 %v319, %v320
        %v322 = vand.u32 %v321, 4294901760
        %323 = vmatmul.mubr.f32.gmra.mrb[0].mxu0 %v322
        %v324 = vpop.f32.mrb[0].mxu0
        %v325 = vadd.f32 %v240, %v324
        %v326 = vpop.f32.mrb[0].mxu0
        %327 = vdwg.mxu0
        %328 = vmatprep.subr.mxu0 0.0
        %v329 = vand.u32 %v232, 4294901760
        %v330 = vsub.f32 %v232, %v329
        %v331 = vand.u32 %v330, 4294901760
        %v332 = vsub.f32 %v330, %v331
        %v333 = vand.u32 %v332, 4294901760
        %334 = vmatpush1.msra.mxu0 %v333
        %335 = vmatprep.subr.mxu0 0.0
        %v336 = vand.u32 %v233, 4294901760
        %v337 = vsub.f32 %v233, %v336
        %v338 = vand.u32 %v337, 4294901760
        %v339 = vsub.f32 %v337, %v338
        %v340 = vand.u32 %v339, 4294901760
        %341 = vmatpush1.msra.mxu0 %v340
        %342 = vmatprep.subr.mxu0 0.0
        %v343 = vand.u32 %v234, 4294901760
        %v344 = vsub.f32 %v234, %v343
        %v345 = vand.u32 %v344, 4294901760
        %v346 = vsub.f32 %v344, %v345
        %v347 = vand.u32 %v346, 4294901760
        %348 = vmatpush1.msra.mxu0 %v347
        %349 = vmatprep.subr.mxu0 0.0
        %v350 = vand.u32 %v235, 4294901760
        %v351 = vsub.f32 %v235, %v350
        %v352 = vand.u32 %v351, 4294901760
        %v353 = vsub.f32 %v351, %v352
        %v354 = vand.u32 %v353, 4294901760
        %355 = vmatpush1.msra.mxu0 %v354
        %356 = vmatprep.subr.mxu0 0.0
        %v357 = vand.u32 %v236, 4294901760
        %v358 = vsub.f32 %v236, %v357
        %v359 = vand.u32 %v358, 4294901760
        %v360 = vsub.f32 %v358, %v359
        %v361 = vand.u32 %v360, 4294901760
        %362 = vmatpush1.msra.mxu0 %v361
        %363 = vmatprep.subr.mxu0 0.0
        %v364 = vand.u32 %v237, 4294901760
        %v365 = vsub.f32 %v237, %v364
        %v366 = vand.u32 %v365, 4294901760
        %v367 = vsub.f32 %v365, %v366
        %v368 = vand.u32 %v367, 4294901760
        %369 = vmatpush1.msra.mxu0 %v368
        %370 = vmatprep.subr.mxu0 0.0
        %v371 = vand.u32 %v238, 4294901760
        %v372 = vsub.f32 %v238, %v371
        %v373 = vand.u32 %v372, 4294901760
        %v374 = vsub.f32 %v372, %v373
        %v375 = vand.u32 %v374, 4294901760
        %376 = vmatpush1.msra.mxu0 %v375
        %377 = vmatprep.subr.mxu0 0.0
        %v378 = vand.u32 %v239, 4294901760
        %v379 = vsub.f32 %v239, %v378
        %v380 = vand.u32 %v379, 4294901760
        %v381 = vsub.f32 %v379, %v380
        %v382 = vand.u32 %v381, 4294901760
        %383 = vmatpush1.msra.mxu0 %v382
        %384 = vmatprep.subr.mxu0 0.0
        %385 = vmatpush1.msra.mxu0 0.0
        %386 = vmatprep.subr.mxu0 0.0
        %387 = vmatpush1.msra.mxu0 0.0
        %388 = vmatprep.subr.mxu0 0.0
        %389 = vmatpush1.msra.mxu0 0.0
        %390 = vmatprep.subr.mxu0 0.0
        %391 = vmatpush1.msra.mxu0 0.0
        %392 = vmatprep.subr.mxu0 0.0
        %393 = vmatpush1.msra.mxu0 0.0
        %394 = vmatprep.subr.mxu0 0.0
        %395 = vmatpush1.msra.mxu0 0.0
        %396 = vmatprep.subr.mxu0 0.0
        %397 = vmatpush1.msra.mxu0 0.0
        %398 = vmatprep.subr.mxu0 0.0
        %399 = vmatpush1.msra.mxu0 0.0
        %400 = vmatprep.subr.mxu0 0.0
        %401 = vmatpush1.msra.mxu0 0.0
        %402 = vmatprep.subr.mxu0 0.0
        %403 = vmatpush1.msra.mxu0 0.0
        %404 = vmatprep.subr.mxu0 0.0
        %405 = vmatpush1.msra.mxu0 0.0
        %406 = vmatprep.subr.mxu0 0.0
        %407 = vmatpush1.msra.mxu0 0.0
        %408 = vmatprep.subr.mxu0 0.0
        %409 = vmatpush1.msra.mxu0 0.0
        %410 = vmatprep.subr.mxu0 0.0
        %411 = vmatpush1.msra.mxu0 0.0
        %412 = vmatprep.subr.mxu0 0.0
        %413 = vmatpush1.msra.mxu0 0.0
        %414 = vmatprep.subr.mxu0 0.0
        %415 = vmatpush1.msra.mxu0 0.0
        %416 = vmatprep.subr.mxu0 0.0
        %417 = vmatpush1.msra.mxu0 0.0
        %418 = vmatprep.subr.mxu0 0.0
        %419 = vmatpush1.msra.mxu0 0.0
        %420 = vmatprep.subr.mxu0 0.0
        %421 = vmatpush1.msra.mxu0 0.0
        %422 = vmatprep.subr.mxu0 0.0
        %423 = vmatpush1.msra.mxu0 0.0
        %424 = vmatprep.subr.mxu0 0.0
        %425 = vmatpush1.msra.mxu0 0.0
        %426 = vmatprep.subr.mxu0 0.0
        %427 = vmatpush1.msra.mxu0 0.0
        %428 = vmatprep.subr.mxu0 0.0
        %429 = vmatpush1.msra.mxu0 0.0
        %430 = vmatprep.subr.mxu0 0.0
        %431 = vmatpush1.msra.mxu0 0.0
        %432 = vmatprep.mubr.f32.mxu0 0.0
        %v433 = vand.u32 %v243, 4294901760
        %434 = vmatmul.mubr.f32.gmra.mrb[0].mxu0 %v433
        %v435 = vpop.f32.mrb[0].mxu0
        %v436 = vadd.f32 %v325, %v435
        %v437 = vpop.f32.mrb[0].mxu0
        %438 = vdwg.mxu0
        %439 = vmatprep.subr.mxu0 0.0
        %v440 = vand.u32 %v232, 4294901760
        %v441 = vsub.f32 %v232, %v440
        %442 = vmatpush1.msra.mxu0 %v441
        %443 = vmatprep.subr.mxu0 0.0
        %v444 = vand.u32 %v233, 4294901760
        %v445 = vsub.f32 %v233, %v444
        %446 = vmatpush1.msra.mxu0 %v445
        %447 = vmatprep.subr.mxu0 0.0
        %v448 = vand.u32 %v234, 4294901760
        %v449 = vsub.f32 %v234, %v448
        %450 = vmatpush1.msra.mxu0 %v449
        %451 = vmatprep.subr.mxu0 0.0
        %v452 = vand.u32 %v235, 4294901760
        %v453 = vsub.f32 %v235, %v452
        %454 = vmatpush1.msra.mxu0 %v453
        %455 = vmatprep.subr.mxu0 0.0
        %v456 = vand.u32 %v236, 4294901760
        %v457 = vsub.f32 %v236, %v456
        %458 = vmatpush1.msra.mxu0 %v457
        %459 = vmatprep.subr.mxu0 0.0
        %v460 = vand.u32 %v237, 4294901760
        %v461 = vsub.f32 %v237, %v460
        %462 = vmatpush1.msra.mxu0 %v461
        %463 = vmatprep.subr.mxu0 0.0
        %v464 = vand.u32 %v238, 4294901760
        %v465 = vsub.f32 %v238, %v464
        %466 = vmatpush1.msra.mxu0 %v465
        %467 = vmatprep.subr.mxu0 0.0
        %v468 = vand.u32 %v239, 4294901760
        %v469 = vsub.f32 %v239, %v468
        %470 = vmatpush1.msra.mxu0 %v469
        %471 = vmatprep.subr.mxu0 0.0
        %472 = vmatpush1.msra.mxu0 0.0
        %473 = vmatprep.subr.mxu0 0.0
        %474 = vmatpush1.msra.mxu0 0.0
        %475 = vmatprep.subr.mxu0 0.0
        %476 = vmatpush1.msra.mxu0 0.0
        %477 = vmatprep.subr.mxu0 0.0
        %478 = vmatpush1.msra.mxu0 0.0
        %479 = vmatprep.subr.mxu0 0.0
        %480 = vmatpush1.msra.mxu0 0.0
        %481 = vmatprep.subr.mxu0 0.0
        %482 = vmatpush1.msra.mxu0 0.0
        %483 = vmatprep.subr.mxu0 0.0
        %484 = vmatpush1.msra.mxu0 0.0
        %485 = vmatprep.subr.mxu0 0.0
        %486 = vmatpush1.msra.mxu0 0.0
        %487 = vmatprep.subr.mxu0 0.0
        %488 = vmatpush1.msra.mxu0 0.0
        %489 = vmatprep.subr.mxu0 0.0
        %490 = vmatpush1.msra.mxu0 0.0
        %491 = vmatprep.subr.mxu0 0.0
        %492 = vmatpush1.msra.mxu0 0.0
        %493 = vmatprep.subr.mxu0 0.0
        %494 = vmatpush1.msra.mxu0 0.0
        %495 = vmatprep.subr.mxu0 0.0
        %496 = vmatpush1.msra.mxu0 0.0
        %497 = vmatprep.subr.mxu0 0.0
        %498 = vmatpush1.msra.mxu0 0.0
        %499 = vmatprep.subr.mxu0 0.0
        %500 = vmatpush1.msra.mxu0 0.0
        %501 = vmatprep.subr.mxu0 0.0
        %502 = vmatpush1.msra.mxu0 0.0
        %503 = vmatprep.subr.mxu0 0.0
        %504 = vmatpush1.msra.mxu0 0.0
        %505 = vmatprep.subr.mxu0 0.0
        %506 = vmatpush1.msra.mxu0 0.0
        %507 = vmatprep.subr.mxu0 0.0
        %508 = vmatpush1.msra.mxu0 0.0
        %509 = vmatprep.subr.mxu0 0.0
        %510 = vmatpush1.msra.mxu0 0.0
        %511 = vmatprep.subr.mxu0 0.0
        %512 = vmatpush1.msra.mxu0 0.0
        %513 = vmatprep.subr.mxu0 0.0
        %514 = vmatpush1.msra.mxu0 0.0
        %515 = vmatprep.subr.mxu0 0.0
        %516 = vmatpush1.msra.mxu0 0.0
        %517 = vmatprep.subr.mxu0 0.0
        %518 = vmatpush1.msra.mxu0 0.0
        %519 = vmatprep.mubr.f32.mxu0 0.0
        %v520 = vand.u32 %v243, 4294901760
        %v521 = vsub.f32 %v243, %v520
        %522 = vmatmul.mubr.f32.gmra.mrb[0].mxu0 %v521
        %v523 = vpop.f32.mrb[0].mxu0
        %v524 = vadd.f32 %v436, %v523
        %v525 = vpop.f32.mrb[0].mxu0
        %526 = vdwg.mxu0
        %527 = vmatprep.subr.mxu0 0.0
        %v528 = vand.u32 %v232, 4294901760
        %529 = vmatpush1.msra.mxu0 %v528
        %530 = vmatprep.subr.mxu0 0.0
        %v531 = vand.u32 %v233, 4294901760
        %532 = vmatpush1.msra.mxu0 %v531
        %533 = vmatprep.subr.mxu0 0.0
        %v534 = vand.u32 %v234, 4294901760
        %535 = vmatpush1.msra.mxu0 %v534
        %536 = vmatprep.subr.mxu0 0.0
        %v537 = vand.u32 %v235, 4294901760
        %538 = vmatpush1.msra.mxu0 %v537
        %539 = vmatprep.subr.mxu0 0.0
        %v540 = vand.u32 %v236, 4294901760
        %541 = vmatpush1.msra.mxu0 %v540
        %542 = vmatprep.subr.mxu0 0.0
        %v543 = vand.u32 %v237, 4294901760
        %544 = vmatpush1.msra.mxu0 %v543
        %545 = vmatprep.subr.mxu0 0.0
        %v546 = vand.u32 %v238, 4294901760
        %547 = vmatpush1.msra.mxu0 %v546
        %548 = vmatprep.subr.mxu0 0.0
        %v549 = vand.u32 %v239, 4294901760
        %550 = vmatpush1.msra.mxu0 %v549
        %551 = vmatprep.subr.mxu0 0.0
        %552 = vmatpush1.msra.mxu0 0.0
        %553 = vmatprep.subr.mxu0 0.0
        %554 = vmatpush1.msra.mxu0 0.0
        %555 = vmatprep.subr.mxu0 0.0
        %556 = vmatpush1.msra.mxu0 0.0
        %557 = vmatprep.subr.mxu0 0.0
        %558 = vmatpush1.msra.mxu0 0.0
        %559 = vmatprep.subr.mxu0 0.0
        %560 = vmatpush1.msra.mxu0 0.0
        %561 = vmatprep.subr.mxu0 0.0
        %562 = vmatpush1.msra.mxu0 0.0
        %563 = vmatprep.subr.mxu0 0.0
        %564 = vmatpush1.msra.mxu0 0.0
        %565 = vmatprep.subr.mxu0 0.0
        %566 = vmatpush1.msra.mxu0 0.0
        %567 = vmatprep.subr.mxu0 0.0
        %568 = vmatpush1.msra.mxu0 0.0
        %569 = vmatprep.subr.mxu0 0.0
        %570 = vmatpush1.msra.mxu0 0.0
        %571 = vmatprep.subr.mxu0 0.0
        %572 = vmatpush1.msra.mxu0 0.0
        %573 = vmatprep.subr.mxu0 0.0
        %574 = vmatpush1.msra.mxu0 0.0
        %575 = vmatprep.subr.mxu0 0.0
        %576 = vmatpush1.msra.mxu0 0.0
        %577 = vmatprep.subr.mxu0 0.0
        %578 = vmatpush1.msra.mxu0 0.0
        %579 = vmatprep.subr.mxu0 0.0
        %580 = vmatpush1.msra.mxu0 0.0
        %581 = vmatprep.subr.mxu0 0.0
        %582 = vmatpush1.msra.mxu0 0.0
        %583 = vmatprep.subr.mxu0 0.0
        %584 = vmatpush1.msra.mxu0 0.0
        %585 = vmatprep.subr.mxu0 0.0
        %586 = vmatpush1.msra.mxu0 0.0
        %587 = vmatprep.subr.mxu0 0.0
        %588 = vmatpush1.msra.mxu0 0.0
        %589 = vmatprep.subr.mxu0 0.0
        %590 = vmatpush1.msra.mxu0 0.0
        %591 = vmatprep.subr.mxu0 0.0
        %592 = vmatpush1.msra.mxu0 0.0
        %593 = vmatprep.subr.mxu0 0.0
        %594 = vmatpush1.msra.mxu0 0.0
        %595 = vmatprep.subr.mxu0 0.0
        %596 = vmatpush1.msra.mxu0 0.0
        %597 = vmatprep.subr.mxu0 0.0
        %598 = vmatpush1.msra.mxu0 0.0
        %599 = vmatprep.mubr.f32.mxu0 0.0
        %v600 = vand.u32 %v243, 4294901760
        %v601 = vsub.f32 %v243, %v600
        %v602 = vand.u32 %v601, 4294901760
        %603 = vmatmul.mubr.f32.gmra.mrb[0].mxu0 %v602
        %v604 = vpop.f32.mrb[0].mxu0
        %v605 = vadd.f32 %v524, %v604
        %v606 = vpop.f32.mrb[0].mxu0
        %607 = vdwg.mxu0
        %608 = vmatprep.subr.mxu0 0.0
        %v609 = vand.u32 %v232, 4294901760
        %v610 = vsub.f32 %v232, %v609
        %v611 = vand.u32 %v610, 4294901760
        %612 = vmatpush1.msra.mxu0 %v611
        %613 = vmatprep.subr.mxu0 0.0
        %v614 = vand.u32 %v233, 4294901760
        %v615 = vsub.f32 %v233, %v614
        %v616 = vand.u32 %v615, 4294901760
        %617 = vmatpush1.msra.mxu0 %v616
        %618 = vmatprep.subr.mxu0 0.0
        %v619 = vand.u32 %v234, 4294901760
        %v620 = vsub.f32 %v234, %v619
        %v621 = vand.u32 %v620, 4294901760
        %622 = vmatpush1.msra.mxu0 %v621
        %623 = vmatprep.subr.mxu0 0.0
        %v624 = vand.u32 %v235, 4294901760
        %v625 = vsub.f32 %v235, %v624
        %v626 = vand.u32 %v625, 4294901760
        %627 = vmatpush1.msra.mxu0 %v626
        %628 = vmatprep.subr.mxu0 0.0
        %v629 = vand.u32 %v236, 4294901760
        %v630 = vsub.f32 %v236, %v629
        %v631 = vand.u32 %v630, 4294901760
        %632 = vmatpush1.msra.mxu0 %v631
        %633 = vmatprep.subr.mxu0 0.0
        %v634 = vand.u32 %v237, 4294901760
        %v635 = vsub.f32 %v237, %v634
        %v636 = vand.u32 %v635, 4294901760
        %637 = vmatpush1.msra.mxu0 %v636
        %638 = vmatprep.subr.mxu0 0.0
        %v639 = vand.u32 %v238, 4294901760
        %v640 = vsub.f32 %v238, %v639
        %v641 = vand.u32 %v640, 4294901760
        %642 = vmatpush1.msra.mxu0 %v641
        %643 = vmatprep.subr.mxu0 0.0
        %v644 = vand.u32 %v239, 4294901760
        %v645 = vsub.f32 %v239, %v644
        %v646 = vand.u32 %v645, 4294901760
        %647 = vmatpush1.msra.mxu0 %v646
        %648 = vmatprep.subr.mxu0 0.0
        %649 = vmatpush1.msra.mxu0 0.0
        %650 = vmatprep.subr.mxu0 0.0
        %651 = vmatpush1.msra.mxu0 0.0
        %652 = vmatprep.subr.mxu0 0.0
        %653 = vmatpush1.msra.mxu0 0.0
        %654 = vmatprep.subr.mxu0 0.0
        %655 = vmatpush1.msra.mxu0 0.0
        %656 = vmatprep.subr.mxu0 0.0
        %657 = vmatpush1.msra.mxu0 0.0
        %658 = vmatprep.subr.mxu0 0.0
        %659 = vmatpush1.msra.mxu0 0.0
        %660 = vmatprep.subr.mxu0 0.0
        %661 = vmatpush1.msra.mxu0 0.0
        %662 = vmatprep.subr.mxu0 0.0
        %663 = vmatpush1.msra.mxu0 0.0
        %664 = vmatprep.subr.mxu0 0.0
        %665 = vmatpush1.msra.mxu0 0.0
        %666 = vmatprep.subr.mxu0 0.0
        %667 = vmatpush1.msra.mxu0 0.0
        %668 = vmatprep.subr.mxu0 0.0
        %669 = vmatpush1.msra.mxu0 0.0
        %670 = vmatprep.subr.mxu0 0.0
        %671 = vmatpush1.msra.mxu0 0.0
        %672 = vmatprep.subr.mxu0 0.0
        %673 = vmatpush1.msra.mxu0 0.0
        %674 = vmatprep.subr.mxu0 0.0
        %675 = vmatpush1.msra.mxu0 0.0
        %676 = vmatprep.subr.mxu0 0.0
        %677 = vmatpush1.msra.mxu0 0.0
        %678 = vmatprep.subr.mxu0 0.0
        %679 = vmatpush1.msra.mxu0 0.0
        %680 = vmatprep.subr.mxu0 0.0
        %681 = vmatpush1.msra.mxu0 0.0
        %682 = vmatprep.subr.mxu0 0.0
        %683 = vmatpush1.msra.mxu0 0.0
        %684 = vmatprep.subr.mxu0 0.0
        %685 = vmatpush1.msra.mxu0 0.0
        %686 = vmatprep.subr.mxu0 0.0
        %687 = vmatpush1.msra.mxu0 0.0
        %688 = vmatprep.subr.mxu0 0.0
        %689 = vmatpush1.msra.mxu0 0.0
        %690 = vmatprep.subr.mxu0 0.0
        %691 = vmatpush1.msra.mxu0 0.0
        %692 = vmatprep.subr.mxu0 0.0
        %693 = vmatpush1.msra.mxu0 0.0
        %694 = vmatprep.subr.mxu0 0.0
        %695 = vmatpush1.msra.mxu0 0.0
        %696 = vmatprep.mubr.f32.mxu0 0.0
        %v697 = vand.u32 %v243, 4294901760
        %698 = vmatmul.mubr.f32.gmra.mrb[0].mxu0 %v697
        %v699 = vpop.f32.mrb[0].mxu0
        %v700 = vadd.f32 %v605, %v699
        %v701 = vpop.f32.mrb[0].mxu0
        %702 = vdwg.mxu0
        %703 = vmatprep.subr.mxu0 0.0
        %v704 = vand.u32 %v232, 4294901760
        %705 = vmatpush1.msra.mxu0 %v704
        %706 = vmatprep.subr.mxu0 0.0
        %v707 = vand.u32 %v233, 4294901760
        %708 = vmatpush1.msra.mxu0 %v707
        %709 = vmatprep.subr.mxu0 0.0
        %v710 = vand.u32 %v234, 4294901760
        %711 = vmatpush1.msra.mxu0 %v710
        %712 = vmatprep.subr.mxu0 0.0
        %v713 = vand.u32 %v235, 4294901760
        %714 = vmatpush1.msra.mxu0 %v713
        %715 = vmatprep.subr.mxu0 0.0
        %v716 = vand.u32 %v236, 4294901760
        %717 = vmatpush1.msra.mxu0 %v716
        %718 = vmatprep.subr.mxu0 0.0
        %v719 = vand.u32 %v237, 4294901760
        %720 = vmatpush1.msra.mxu0 %v719
        %721 = vmatprep.subr.mxu0 0.0
        %v722 = vand.u32 %v238, 4294901760
        %723 = vmatpush1.msra.mxu0 %v722
        %724 = vmatprep.subr.mxu0 0.0
        %v725 = vand.u32 %v239, 4294901760
        %726 = vmatpush1.msra.mxu0 %v725
        %727 = vmatprep.subr.mxu0 0.0
        %728 = vmatpush1.msra.mxu0 0.0
        %729 = vmatprep.subr.mxu0 0.0
        %730 = vmatpush1.msra.mxu0 0.0
        %731 = vmatprep.subr.mxu0 0.0
        %732 = vmatpush1.msra.mxu0 0.0
        %733 = vmatprep.subr.mxu0 0.0
        %734 = vmatpush1.msra.mxu0 0.0
        %735 = vmatprep.subr.mxu0 0.0
        %736 = vmatpush1.msra.mxu0 0.0
        %737 = vmatprep.subr.mxu0 0.0
        %738 = vmatpush1.msra.mxu0 0.0
        %739 = vmatprep.subr.mxu0 0.0
        %740 = vmatpush1.msra.mxu0 0.0
        %741 = vmatprep.subr.mxu0 0.0
        %742 = vmatpush1.msra.mxu0 0.0
        %743 = vmatprep.subr.mxu0 0.0
        %744 = vmatpush1.msra.mxu0 0.0
        %745 = vmatprep.subr.mxu0 0.0
        %746 = vmatpush1.msra.mxu0 0.0
        %747 = vmatprep.subr.mxu0 0.0
        %748 = vmatpush1.msra.mxu0 0.0
        %749 = vmatprep.subr.mxu0 0.0
        %750 = vmatpush1.msra.mxu0 0.0
        %751 = vmatprep.subr.mxu0 0.0
        %752 = vmatpush1.msra.mxu0 0.0
        %753 = vmatprep.subr.mxu0 0.0
        %754 = vmatpush1.msra.mxu0 0.0
        %755 = vmatprep.subr.mxu0 0.0
        %756 = vmatpush1.msra.mxu0 0.0
        %757 = vmatprep.subr.mxu0 0.0
        %758 = vmatpush1.msra.mxu0 0.0
        %759 = vmatprep.subr.mxu0 0.0
        %760 = vmatpush1.msra.mxu0 0.0
        %761 = vmatprep.subr.mxu0 0.0
        %762 = vmatpush1.msra.mxu0 0.0
        %763 = vmatprep.subr.mxu0 0.0
        %764 = vmatpush1.msra.mxu0 0.0
        %765 = vmatprep.subr.mxu0 0.0
        %766 = vmatpush1.msra.mxu0 0.0
        %767 = vmatprep.subr.mxu0 0.0
        %768 = vmatpush1.msra.mxu0 0.0
        %769 = vmatprep.subr.mxu0 0.0
        %770 = vmatpush1.msra.mxu0 0.0
        %771 = vmatprep.subr.mxu0 0.0
        %772 = vmatpush1.msra.mxu0 0.0
        %773 = vmatprep.subr.mxu0 0.0
        %774 = vmatpush1.msra.mxu0 0.0
        %775 = vmatprep.mubr.f32.mxu0 0.0
        %v776 = vand.u32 %v243, 4294901760
        %777 = vmatmul.mubr.f32.gmra.mrb[0].mxu0 %v776
        %v778 = vpop.f32.mrb[0].mxu0
        %v779 = vadd.f32 %v700, %v778
        %v780 = vpop.f32.mrb[0].mxu0
        %781 = vdwg.mxu0
        %782 = vst [vmem:[%s211] sm:$0xff] %v779
        %s783 = sand.u32 %s115, 1
        %s784 = scalar_lea.sflag [#allocation4], %s783
        %s785 = sand.u32 %s115, 1
        %s786 = smul.addr %s785, 8
        %s787 = scalar_lea.vmem [#allocation5], %s786
        // Predicated region
        $region37: #{tpu_custom_call.1} parent=31 // pred_check
          %p788 = pneg %p125
        $region38: #{tpu_custom_call.1} parent=31 // pred_check_branch
          %790 = sbr.rel (%p788) target = $region40
        $region39: #{tpu_custom_call.1} parent=31 // pred_region
          %s792 = ssub.s32 128, 128
          %793 = vsyncadd %s784, %s792
          %s794 = sadd.s32 %s22, %s23
          %s795 = smul.addr %s794, 128
          %s796 = scalar_lea.hbm %s3, %s795
          %s798 = sshll.u32 %s787, 4
          %s799 = int_to_ptr.vmem [resolvable:$true] %s798
          %801 = dma.vmem_to_hbm [thread:$0]  %s799, 128, %s796, %s784
        $region40: #{tpu_custom_call.1} parent=31 // pred_fallthru
          _
      $region32: #{tpu_custom_call.1} parent=5 // pred_fallthru
        _
      %p802 = scmp.le.s32.totalorder 2, %s13
      // Predicated region
      $region41: #{tpu_custom_call.1} parent=5 // pred_check
        %p803 = pneg %p802
      $region42: #{tpu_custom_call.1} parent=5 // pred_check_branch
        %805 = sbr.rel (%p803) target = $region44
      $region43: #{tpu_custom_call.1} parent=5 // pred_region
        %s806 = ssub.s32 %s13, 2
        // Predicated region
        $region45: #{tpu_custom_call.1} parent=43 // pred_check
          %p807 = pneg %p131
        $region46: #{tpu_custom_call.1} parent=43 // pred_check_branch
          %809 = sbr.rel (%p807) target = $region48
        $region47: #{tpu_custom_call.1} parent=43 // pred_region
          %s810 = sand.u32 %s116, 1
          %s811 = scalar_lea.sflag [#allocation4], %s810
          %s812 = sand.u32 %s116, 1
          %s813 = smul.addr %s812, 8
          %s814 = scalar_lea.vmem [#allocation5], %s813
          %815 = dma.done %s811, 128
        $region48: #{tpu_custom_call.1} parent=43 // pred_fallthru
          _
      $region44: #{tpu_custom_call.1} parent=5 // pred_fallthru
        _
    $region6: #{tpu_custom_call.1} parent=1 // loop_footer
      %s17 = sadd.s32 1, %s13
    $region7: #{tpu_custom_call.1} parent=1 // loop_footer_branch
      %12 = sbr.rel target = $region3
    $region8: #{tpu_custom_call.1} parent=1 // loop_exit
      _
    %816 = vsyncpa [#allocation3], 1
    %s817 = scalar_lea.sflag [#allocation3], 1
    %818 = vsyncpa %s817, 1
    %819 = vsyncpa [#allocation4], 1
    %s820 = scalar_lea.sflag [#allocation4], 1
    %821 = vsyncpa %s820, 1

</llo_original>
